<compile_context>
chip_gen: v7x
topology: tpu7x:2x2x1
jax: 0.10.0
libtpu: 0.0.40
codegen_flags: <defaults>
</compile_context>

<pallas_src>
import jax
import jax.numpy as jnp
from jax.experimental import pallas as pl
from jax.experimental.pallas import tpu as pltpu


def _round_up(n, m):
    return (n + m - 1) // m * m


def _logreg_kernel(x_ref, w2_ref, b2_ref, out_ref):
    # x_ref:  [TB, D] f32 (VMEM, pipelined)      w2_ref: [D, 2] f32 (VMEM, resident)
    # b2_ref: [1, 2]  f32 (VMEM, resident)       out_ref: [TB, 2] f32 (VMEM)
    # Both output columns from one MXU contraction: column 0 uses (-w, -b) so that
    # sigmoid(z0) == 1 - sigmoid(x@w + b); column 1 is the plain sigmoid(x@w + b).
    z = jnp.dot(x_ref[...], w2_ref[...], preferred_element_type=jnp.float32)  # [TB, 2]
    z = z + b2_ref[...]                                                        # bcast [1, 2]
    p = pl.reciprocal(1.0 + jnp.exp(-z), approx=False)                         # exact sigmoid
    out_ref[...] = p.astype(out_ref.dtype)


def logistic_regressor(x, weight, bias, *, block_rows=8192, xla_fallback_rows=0):
    """x: [B, D] f32, weight: [1, D] (PyTorch Linear layout), bias: [1].

    Returns [B, 2] = concat([1 - sigmoid(x@w.T + b), sigmoid(x@w.T + b)], axis=1).
    """
    B, D = x.shape
    x = x.astype(jnp.float32)
    w = weight.reshape(1, D).astype(jnp.float32)
    b = bias.reshape(1).astype(jnp.float32)

    # Two-column weight/bias so one MXU matmul produces both output columns.
    w2 = jnp.concatenate([-w, w], axis=0).T          # [D, 2]
    b2 = jnp.concatenate([-b, b]).reshape(1, 2)      # [1, 2]

    # Tiny-batch XLA fallback (kernel launch overhead dominates); disabled by default.
    if B < xla_fallback_rows:
        z = x @ w2 + b2
        return jax.nn.sigmoid(z)

    # Batch tile: multiple of 8 sublanes, capped at block_rows.  No host-side padding:
    # a cdiv grid lets Pallas handle the ragged last block.
    TB = min(block_rows, _round_up(B, 8))
    grid = (pl.cdiv(B, TB),)

    return pl.pallas_call(
        _logreg_kernel,
        out_shape=jax.ShapeDtypeStruct((B, 2), jnp.float32),
        grid_spec=pltpu.PrefetchScalarGridSpec(
            num_scalar_prefetch=0,
            grid=grid,
            in_specs=[
                pl.BlockSpec((TB, D), lambda i: (i, 0)),   # x tile (pipelined)
                pl.BlockSpec((D, 2), lambda i: (0, 0)),    # two-column weight, resident
                pl.BlockSpec((1, 2), lambda i: (0, 0)),    # two-column bias, resident
            ],
            out_specs=pl.BlockSpec((TB, 2), lambda i: (i, 0)),
        ),
        compiler_params=pltpu.CompilerParams(
            dimension_semantics=("parallel",),           # batch axis is fully data-parallel
            vmem_limit_bytes=48 * 1024 * 1024,           # <= v7x 64 MiB physical; v5e/v6e OK
        ),
    )(x, w2, b2)


def _reference(x, weight, bias):
    z = x @ weight.T + bias
    p = jax.nn.sigmoid(z)
    return jnp.concatenate([1.0 - p, p], axis=1)


if __name__ == "__main__":
    key = jax.random.PRNGKey(0)
    kx, kw, kb, kx2 = jax.random.split(key, 4)

    B, input_dim, output_dim = 8, 23, 2
    x = jax.random.normal(kx, (B, input_dim), dtype=jnp.float32)
    # Deterministic parameter init (mimics nn.Linear uniform(-1/sqrt(D), 1/sqrt(D))).
    bound = 1.0 / jnp.sqrt(jnp.float32(input_dim))
    weight = jax.random.uniform(kw, (output_dim - 1, input_dim),
                                minval=-bound, maxval=bound, dtype=jnp.float32)
    bias = jax.random.uniform(kb, (output_dim - 1,),
                              minval=-bound, maxval=bound, dtype=jnp.float32)

    # Single-tile path.
    out = jax.block_until_ready(logistic_regressor(x, weight, bias))
    ref = _reference(x, weight, bias)
    assert out.shape == (B, 2)
    assert jnp.allclose(out, ref, atol=1e-5, rtol=1e-5), (out, ref)

    # Multi-tile path with a ragged last block (exercises cdiv grid + parallel axis).
    B2 = 300
    x2 = jax.random.normal(kx2, (B2, input_dim), dtype=jnp.float32)
    out2 = jax.block_until_ready(logistic_regressor(x2, weight, bias, block_rows=128))
    ref2 = _reference(x2, weight, bias)
    assert out2.shape == (B2, 2)
    assert jnp.allclose(out2, ref2, atol=1e-5, rtol=1e-5)

    print("KERNEL_OK")
</pallas_src>

<mosaic_0001>
module attributes {stable_mosaic.version = 11 : i64} {
  func.func @_logreg_kernel(%arg0: i32, %arg1: memref<8x23xf32, #tpu.memory_space<vmem>>, %arg2: memref<23x2xf32, #tpu.memory_space<vmem>>, %arg3: memref<1x2xf32, #tpu.memory_space<vmem>>, %arg4: memref<8x2xf32, #tpu.memory_space<vmem>>) attributes {dimension_semantics = [#tpu.dimension_semantics<parallel>], iteration_bounds = array<i64: 1>, scalar_prefetch = 0 : i64, scratch_operands = 0 : i64, tpu.core_type = #tpu.core_type<tc>, window_params = [{transform_indices = @transform_0, window_bounds = array<i64: 8, 23>}, {pipeline_mode = #tpu.pipeline_mode<synchronous>, transform_indices = @transform_1, window_bounds = array<i64: 23, 2>}, {pipeline_mode = #tpu.pipeline_mode<synchronous>, transform_indices = @transform_2, window_bounds = array<i64: 1, 2>}, {transform_indices = @transform_3, window_bounds = array<i64: 8, 2>}]} {
    %c0 = arith.constant 0 : index
    %c0_0 = arith.constant 0 : index
    %0 = vector.load %arg1[%c0, %c0_0] : memref<8x23xf32, #tpu.memory_space<vmem>>, vector<8x23xf32>
    %c0_1 = arith.constant 0 : index
    %c0_2 = arith.constant 0 : index
    %1 = vector.load %arg2[%c0_1, %c0_2] : memref<23x2xf32, #tpu.memory_space<vmem>>, vector<23x2xf32>
    %cst = arith.constant dense<0.000000e+00> : vector<8x2xf32>
    %2 = tpu.matmul %0, %1, %cst {dimension_numbers = #tpu.dot_dimension_numbers<[1], [0], [0], [1], [0, 0, 1, 1], [], []>} : vector<8x23xf32>, vector<23x2xf32>, vector<8x2xf32> -> vector<8x2xf32>
    %c0_3 = arith.constant 0 : index
    %c0_4 = arith.constant 0 : index
    %3 = vector.load %arg3[%c0_3, %c0_4] : memref<1x2xf32, #tpu.memory_space<vmem>>, vector<1x2xf32>
    %4 = vector.broadcast %3 : vector<1x2xf32> to vector<8x2xf32>
    %5 = arith.addf %2, %4 : vector<8x2xf32>
    %cst_5 = arith.constant 0.000000e+00 : f32
    %6 = vector.broadcast %cst_5 : f32 to vector<8x2xf32>
    %7 = arith.subf %6, %5 : vector<8x2xf32>
    %8 = math.exp %7 : vector<8x2xf32>
    %cst_6 = arith.constant 1.000000e+00 : f32
    %9 = vector.broadcast %cst_6 : f32 to vector<8x2xf32>
    %10 = arith.addf %9, %8 : vector<8x2xf32>
    %11 = tpu.reciprocal %10 : vector<8x2xf32> -> vector<8x2xf32>
    %c0_7 = arith.constant 0 : index
    %c0_8 = arith.constant 0 : index
    %12 = vector.load %arg4[%c0_7, %c0_8] : memref<8x2xf32, #tpu.memory_space<vmem>>, vector<8x2xf32>
    tpu.vector_store %arg4[%c0_7, %c0_8], %11 {strides = array<i32>} : memref<8x2xf32, #tpu.memory_space<vmem>>, vector<8x2xf32>,
    return
  }
  func.func @transform_0(%arg0: i32) -> (i32, i32) {
    %c0_i32 = arith.constant 0 : i32
    %c0_i32_0 = arith.constant 0 : i32
    return %arg0, %c0_i32 : i32, i32
  }
  func.func @transform_1(%arg0: i32) -> (i32, i32) {
    %c0_i32 = arith.constant 0 : i32
    %c0_i32_0 = arith.constant 0 : i32
    %c0_i32_1 = arith.constant 0 : i32
    return %c0_i32, %c0_i32_0 : i32, i32
  }
  func.func @transform_2(%arg0: i32) -> (i32, i32) {
    %c0_i32 = arith.constant 0 : i32
    %c0_i32_0 = arith.constant 0 : i32
    %c0_i32_1 = arith.constant 0 : i32
    return %c0_i32, %c0_i32_0 : i32, i32
  }
  func.func @transform_3(%arg0: i32) -> (i32, i32) {
    %c0_i32 = arith.constant 0 : i32
    %c0_i32_0 = arith.constant 0 : i32
    return %arg0, %c0_i32 : i32, i32
  }
}

</mosaic_0001>

<llo_original>
// kernel: tpu_custom_call.1
$region0: #{tpu_custom_call.1}
  #allocation0 [shape = 'u32[]', space=smem, size = 0x4, offset = 0x4, fixed_abs, tag = 'smem constant byte address 0x4 - core index']
  #allocation1 [shape = 'u32[144,128]{1,0:T(1,128)}', space=vmem, size = 0x12000, scoped, tag = 'internal scratch']
  %s0 = inlined_call_operand.vmem [shape: f32[8,23], index: 0, kind: input, shape index: {}]
  %s1 = inlined_call_operand.vmem [shape: f32[23,2], index: 1, kind: input, shape index: {}]
  %s2 = inlined_call_operand.vmem [shape: f32[1,2], index: 2, kind: input, shape index: {}]
  %s3 = inlined_call_operand.vmem [shape: f32[8,2], index: 3, kind: output, shape index: {}]
  %s4 = sld [smem:[#allocation0]]
  $region22: #{tpu_custom_call.1} parent=0
    _
  %s6 = ssub.s32 1, %s4
  %s7 = scalar_select 0, %s6, %s4
  // Predicated region
  $region2: #{tpu_custom_call.1} parent=0 // pred_check
    _
  $region3: #{tpu_custom_call.1} parent=0 // pred_check_branch
    %9 = sbr.rel (0) target = $region5
  $region4: #{tpu_custom_call.1} parent=0 // pred_region
    _
  $region5: #{tpu_custom_call.1} parent=0 // pred_fallthru
    _
  // Predicated region
  $region6: #{tpu_custom_call.1} parent=0 // pred_check
    _
  $region7: #{tpu_custom_call.1} parent=0 // pred_check_branch
    %11 = sbr.rel (0) target = $region9
  $region8: #{tpu_custom_call.1} parent=0 // pred_region
    _
  $region9: #{tpu_custom_call.1} parent=0 // pred_fallthru
    _
  // Predicated region
  $region10: #{tpu_custom_call.1} parent=0 // pred_check
    _
  $region11: #{tpu_custom_call.1} parent=0 // pred_check_branch
    %13 = sbr.rel (0) target = $region13
  $region12: #{tpu_custom_call.1} parent=0 // pred_region
    _
  $region13: #{tpu_custom_call.1} parent=0 // pred_fallthru
    _
  %v14 = vld [vmem:[%s0] sm:$0xff]
  %v15 = vld [vmem:[%s1] sm:$0xff]
  %v16 = vld [vmem:[%s1 + $0x8] sm:$0xff]
  %v17 = vld [vmem:[%s1 + $0x10] sm:$0x7f]
  %v18 = vld [vmem:[%s2] sm:$0x1]
  %v20 = vlaneseq
  %v21 = vshrl.u32 %v20, 7
  %v22 = vsub.s32 0, %v21
  %v23 = vrot.slane %v18, %v22
  %vm25 = vcmask 187392
  %v27 = vsel %vm25, %v14, 0
  %vm29 = vcmask 1046528
  %v31 = vsel %vm29, %v17, 0
  %33 = vmatprep.subr.mxu0 0.0
  %34 = vmatpush1.msra.mxu0 %v15
  %35 = vmatprep.subr.mxu0 0.0
  %36 = vmatpush1.msra.mxu0 %v16
  %37 = vmatprep.subr.mxu0 0.0
  %38 = vmatpush1.msra.mxu0 %v31
  %39 = vmatprep.subr.mxu0 0.0
  %40 = vmatpush1.msra.mxu0 0.0
  %41 = vmatprep.subr.mxu0 0.0
  %42 = vmatpush1.msra.mxu0 0.0
  %43 = vmatprep.subr.mxu0 0.0
  %44 = vmatpush1.msra.mxu0 0.0
  %45 = vmatprep.subr.mxu0 0.0
  %46 = vmatpush1.msra.mxu0 0.0
  %47 = vmatprep.subr.mxu0 0.0
  %48 = vmatpush1.msra.mxu0 0.0
  %49 = vmatprep.subr.mxu0 0.0
  %50 = vmatpush1.msra.mxu0 0.0
  %51 = vmatprep.subr.mxu0 0.0
  %52 = vmatpush1.msra.mxu0 0.0
  %53 = vmatprep.subr.mxu0 0.0
  %54 = vmatpush1.msra.mxu0 0.0
  %55 = vmatprep.subr.mxu0 0.0
  %56 = vmatpush1.msra.mxu0 0.0
  %57 = vmatprep.subr.mxu0 0.0
  %58 = vmatpush1.msra.mxu0 0.0
  %59 = vmatprep.subr.mxu0 0.0
  %60 = vmatpush1.msra.mxu0 0.0
  %61 = vmatprep.subr.mxu0 0.0
  %62 = vmatpush1.msra.mxu0 0.0
  %63 = vmatprep.subr.mxu0 0.0
  %64 = vmatpush1.msra.mxu0 0.0
  %65 = vmatprep.subr.mxu0 0.0
  %66 = vmatpush1.msra.mxu0 0.0
  %67 = vmatprep.subr.mxu0 0.0
  %68 = vmatpush1.msra.mxu0 0.0
  %69 = vmatprep.subr.mxu0 0.0
  %70 = vmatpush1.msra.mxu0 0.0
  %71 = vmatprep.subr.mxu0 0.0
  %72 = vmatpush1.msra.mxu0 0.0
  %73 = vmatprep.subr.mxu0 0.0
  %74 = vmatpush1.msra.mxu0 0.0
  %75 = vmatprep.subr.mxu0 0.0
  %76 = vmatpush1.msra.mxu0 0.0
  %77 = vmatprep.subr.mxu0 0.0
  %78 = vmatpush1.msra.mxu0 0.0
  %79 = vmatprep.subr.mxu0 0.0
  %80 = vmatpush1.msra.mxu0 0.0
  %81 = vmatprep.subr.mxu0 0.0
  %82 = vmatpush1.msra.mxu0 0.0
  %83 = vmatprep.subr.mxu0 0.0
  %84 = vmatpush1.msra.mxu0 0.0
  %85 = vmatprep.subr.mxu0 0.0
  %86 = vmatpush1.msra.mxu0 0.0
  %87 = vmatprep.subr.mxu0 0.0
  %88 = vmatpush1.msra.mxu0 0.0
  %89 = vmatprep.subr.mxu0 0.0
  %90 = vmatpush1.msra.mxu0 0.0
  %91 = vmatprep.subr.mxu0 0.0
  %92 = vmatpush1.msra.mxu0 0.0
  %93 = vmatprep.subr.mxu0 0.0
  %94 = vmatpush1.msra.mxu0 0.0
  %95 = vmatprep.subr.mxu0 0.0
  %96 = vmatpush1.msra.mxu0 0.0
  %97 = vmatprep.mubr.f32.mxu0 0.0
  %98 = vmatmul.mubr.f32.gmra.mrb[0].mxu0 %v27
  %v99 = vpop.f32.mrb[0].mxu0
  %v100 = vadd.f32 %v23, %v99
  %v101 = vpop.f32.mrb[0].mxu0
  %102 = vdwg.mxu0
  %v103 = vsub.f32 0.0, %v100
  %v104 = vmul.f32 %v103, 1.442695
  %v105 = vpow.pop %v104
  %v106 = vadd.f32 %v105, 1.0
  %v107 = vrcp.pop %v106
  %vm108 = vcmask 15360
  %109 = vst.msk [vmem:[%s3] sm:$0xff] %vm108, %v107
  // Predicated region
  $region14: #{tpu_custom_call.1} parent=0 // pred_check
    _
  $region15: #{tpu_custom_call.1} parent=0 // pred_check_branch
    %111 = sbr.rel (0) target = $region17
  $region16: #{tpu_custom_call.1} parent=0 // pred_region
    _
  $region17: #{tpu_custom_call.1} parent=0 // pred_fallthru
    _
  // Predicated region
  $region18: #{tpu_custom_call.1} parent=0 // pred_check
    _
  $region19: #{tpu_custom_call.1} parent=0 // pred_check_branch
    %113 = sbr.rel (0) target = $region21
  $region20: #{tpu_custom_call.1} parent=0 // pred_region
    _
  $region21: #{tpu_custom_call.1} parent=0 // pred_fallthru
    _

</llo_original>
